<compile_context>
chip_gen: v7x
topology: tpu7x:2x2x1
jax: 0.10.0
libtpu: 0.0.40
codegen_flags: <defaults>
</compile_context>

<pallas_src>
import functools

import jax
import jax.numpy as jnp
from jax.experimental import pallas as pl
from jax.experimental.pallas import tpu as pltpu


_BF16_AUTO_MIN_N = 2048   # below this the forward is launch/DMA-latency bound; bf16 buys nothing


@functools.lru_cache(maxsize=1)
def _vmem_budget_bytes():
    """~3/4 of this generation's VMEM (v5e/v6e: 128 MiB, v7x: 64 MiB), leaving headroom."""
    cap = 64 * 1024 * 1024                       # conservative fallback (v7x physical VMEM)
    try:
        cap = int(getattr(pltpu.get_tpu_info(), "vmem_capacity_bytes", cap))
    except Exception:                            # not on a TPU / interpret mode
        pass
    return (cap * 3) // 4


# --------------------------- fused whole-graph path (small N) ---------------------------

def _gcn_fused_kernel(a_ref, x_ref, p1_ref, p2_ref, o_ref, *,
                      f_in, hidden, xw_first_1, xw_first_2, compute_dtype):
    """Fused 2-layer GCN; all operands and the intermediate H1 stay in VMEM."""
    a = a_ref[...].astype(compute_dtype)         # cast on the VPU, not in the wrapper
    x = x_ref[...].astype(compute_dtype)
    w1 = p1_ref[:f_in, :].astype(compute_dtype)  # packed [W1; b1]
    b1 = p1_ref[f_in:f_in + 1, :]                # bias stays f32 (added to f32 accumulator)
    w2 = p2_ref[:hidden, :].astype(compute_dtype)
    b2 = p2_ref[hidden:hidden + 1, :]

    # ---- layer 1: H1 = relu(A_hat @ X @ W1 + b1), f32 MXU accumulation ----
    if xw_first_1:                               # shrink the lane dim before the N^2 matmul
        t = jnp.dot(x, w1, preferred_element_type=jnp.float32)
        h1 = jnp.dot(a, t.astype(compute_dtype), preferred_element_type=jnp.float32)
    else:
        t = jnp.dot(a, x, preferred_element_type=jnp.float32)
        h1 = jnp.dot(t.astype(compute_dtype), w1, preferred_element_type=jnp.float32)
    h1 = jnp.maximum(h1 + b1, 0.0).astype(compute_dtype)

    # ---- layer 2: out = A_hat @ H1 @ W2 + b2 ----
    if xw_first_2:                               # label < hidden -> multiply by W2 first
        t2 = jnp.dot(h1, w2, preferred_element_type=jnp.float32)
        h2 = jnp.dot(a, t2.astype(compute_dtype), preferred_element_type=jnp.float32)
    else:
        t2 = jnp.dot(a, h1, preferred_element_type=jnp.float32)
        h2 = jnp.dot(t2.astype(compute_dtype), w2, preferred_element_type=jnp.float32)

    o_ref[...] = (h2 + b2).astype(o_ref.dtype)


def _gcn_fused(a_hat, x, p1, p2, *, f_in, hidden, label, compute_dtype, budget):
    n = a_hat.shape[0]
    kernel = functools.partial(
        _gcn_fused_kernel, f_in=f_in, hidden=hidden,
        xw_first_1=hidden < f_in, xw_first_2=label < hidden,
        compute_dtype=compute_dtype)
    # Grid-less pallas_call: one invocation, whole arrays mapped into VMEM once.
    # With no grid there is no pipeline, so nothing gets double-buffered.
    return pl.pallas_call(
        kernel,
        out_shape=jax.ShapeDtypeStruct((n, label), jnp.float32),
        compiler_params=pltpu.CompilerParams(vmem_limit_bytes=budget),
    )(a_hat, x, p1, p2)


def _fused_vmem_estimate(n, f_in, hidden, label, use_bf16):
    cast = 2 if use_bf16 else 0                  # extra in-kernel bf16 copies of A / X
    a_bytes = n * n * (4 + cast)
    x_bytes = n * f_in * (4 + cast)
    p_bytes = ((f_in + 1) * hidden + (hidden + 1) * label) * 4
    out_bytes = n * label * 4
    tmp_bytes = 4 * n * max(f_in, hidden, label) * 4   # f32 intermediates / relayout headroom
    return a_bytes + x_bytes + p_bytes + out_bytes + tmp_bytes


# ------------------------- row-tiled two-pass path (large N) ---------------------------

def _gcn_layer_tiled_kernel(a_ref, m_ref, p_ref, o_ref, *, d_in, apply_relu, compute_dtype):
    """One GraphConv layer for one (TM, N) row tile of A_hat: act(A_tile @ M @ W + b)."""
    a = a_ref[...].astype(compute_dtype)
    m = m_ref[...].astype(compute_dtype)         # resident node features (constant index_map)
    w = p_ref[:d_in, :].astype(compute_dtype)    # packed [W; b], resident
    b = p_ref[d_in:d_in + 1, :]
    # A-first order: no cross-tile recomputation of M @ W, and with d_in <= 256 the
    # [TM, N] @ [N, d_in] matmul already costs one systolic pass per contraction chunk.
    # TODO(synk): for very wide input features (d_in >> 256) precompute X @ W1 with a
    # separate tiled matmul (or tile the contraction dim) instead of keeping X resident.
    t = jnp.dot(a, m, preferred_element_type=jnp.float32)
    h = jnp.dot(t.astype(compute_dtype), w, preferred_element_type=jnp.float32) + b
    if apply_relu:
        h = jnp.maximum(h, 0.0)
    o_ref[...] = h.astype(o_ref.dtype)


def _gcn_layer_tiled(a_hat, m, p, *, d_in, d_out, apply_relu, compute_dtype, tm, budget):
    n = a_hat.shape[0]
    kernel = functools.partial(_gcn_layer_tiled_kernel, d_in=d_in,
                               apply_relu=apply_relu, compute_dtype=compute_dtype)
    return pl.pallas_call(
        kernel,
        out_shape=jax.ShapeDtypeStruct((n, d_out), jnp.float32),
        grid=(pl.cdiv(n, tm),),
        in_specs=[
            pl.BlockSpec((tm, n), lambda i: (i, 0)),   # streamed row tile of A_hat (pipelined)
            pl.BlockSpec(m.shape, lambda i: (0, 0)),   # node features: DMA'd once, resident
            pl.BlockSpec(p.shape, lambda i: (0, 0)),   # packed [W; b]: DMA'd once, resident
        ],
        out_specs=pl.BlockSpec((tm, d_out), lambda i: (i, 0)),
        compiler_params=pltpu.CompilerParams(
            # Independent row tiles -> 'parallel' lets Mosaic shard them across both
            # TensorCores on v7x (no effect on single-core v5e/v6e).
            dimension_semantics=("parallel",),
            vmem_limit_bytes=budget),
    )(a_hat, m, p)


def _pick_row_tile(n, f_in, hidden, label, requested, budget, use_bf16):
    cast = 2 if use_bf16 else 0
    d_max = max(f_in, hidden)
    tm = max(8, (min(requested, n) // 8) * 8)
    while tm > 8:
        est = (2 * tm * n * 4 + tm * n * cast            # double-buffered A row tile (+cast copy)
               + n * d_max * (4 + cast)                  # resident node features
               + 2 * tm * max(hidden, label) * 4         # double-buffered output tile
               + 2 * tm * d_max * 4)                     # f32 intermediates
        if est <= budget:
            break
        tm //= 2
    return max(tm, 8)


# ------------------------------------ dispatcher ---------------------------------------

@functools.partial(jax.jit, static_argnames=("use_bf16", "row_tile", "force_tiled"))
def gcn_net_forward(a_hat, features, params, *, use_bf16=None, row_tile=256,
                    force_tiled=False):
    """Full Gcn_Net forward. (nn.Dropout is never applied in the reference forward.)"""
    w1, b1, w2, b2 = params
    n = a_hat.shape[0]
    f_in = features.shape[1]
    hidden = w1.shape[1]
    label = w2.shape[1]

    if use_bf16 is None:                         # auto: bf16 only once the MXU/DMA dominate
        use_bf16 = n >= _BF16_AUTO_MIN_N
    compute_dtype = jnp.bfloat16 if use_bf16 else jnp.float32
    budget = _vmem_budget_bytes()

    # Pack [W; b] per layer -> 2 parameter DMAs instead of 4 (pre-pack once for reuse).
    p1 = jnp.concatenate([w1, b1.reshape(1, hidden)], axis=0).astype(jnp.float32)
    p2 = jnp.concatenate([w2, b2.reshape(1, label)], axis=0).astype(jnp.float32)

    if not force_tiled and _fused_vmem_estimate(n, f_in, hidden, label, use_bf16) <= budget:
        return _gcn_fused(a_hat, features, p1, p2, f_in=f_in, hidden=hidden, label=label,
                          compute_dtype=compute_dtype, budget=budget)

    # Row-tiled two-pass path: A_hat is streamed twice as (TM, N) tiles, H1 makes one
    # small [N, hidden] HBM round trip between the two pallas_calls.
    tm = _pick_row_tile(n, f_in, hidden, label, row_tile, budget, use_bf16)
    h1 = _gcn_layer_tiled(a_hat, features, p1, d_in=f_in, d_out=hidden, apply_relu=True,
                          compute_dtype=compute_dtype, tm=tm, budget=budget)
    return _gcn_layer_tiled(a_hat, h1, p2, d_in=hidden, d_out=label, apply_relu=False,
                            compute_dtype=compute_dtype, tm=tm, budget=budget)


# -------------------------------------- helpers ----------------------------------------

def make_normalized_adjacency(adj):
    """A_hat = D^{-1/2} A D^{-1/2} (DGL GraphConv norm='both')."""
    deg = jnp.sum(adj, axis=1)
    d_inv_sqrt = jnp.where(deg > 0, 1.0 / jnp.sqrt(jnp.maximum(deg, 1e-12)), 0.0)
    return adj * d_inv_sqrt[:, None] * d_inv_sqrt[None, :]


def init_params(key, feature_number, hidden, label_number):
    k1, k2 = jax.random.split(key)

    def glorot(k, fan_in, fan_out):              # DGL GraphConv reset_parameters; bias zeros
        limit = jnp.sqrt(6.0 / (fan_in + fan_out))
        return jax.random.uniform(k, (fan_in, fan_out), jnp.float32, -limit, limit)

    w1 = glorot(k1, feature_number, hidden)
    b1 = jnp.zeros((1, hidden), jnp.float32)
    w2 = glorot(k2, hidden, label_number)
    b2 = jnp.zeros((1, label_number), jnp.float32)
    return (w1, b1, w2, b2)


def _reference_forward(a_hat, features, params):
    w1, b1, w2, b2 = params
    h1 = jnp.maximum(a_hat @ features @ w1 + b1, 0.0)
    return a_hat @ h1 @ w2 + b2


def _random_graph(key, n):
    logits = jax.random.uniform(key, (n, n))
    adj = (logits + logits.T > 1.3).astype(jnp.float32)
    adj = jnp.maximum(adj, jnp.eye(n, dtype=jnp.float32))   # self-loops: no zero-degree nodes
    return make_normalized_adjacency(adj)


if __name__ == "__main__":
    feature_number, hidden, label_number = 16, 16, 8        # hidden fixed to 16 in the module
    key = jax.random.PRNGKey(0)
    k_adj1, k_adj2, k_feat1, k_feat2, k_param = jax.random.split(key, 5)
    params = init_params(k_param, feature_number, hidden, label_number)

    # --- small graph: fused whole-graph kernel (grid-less, everything resident in VMEM) ---
    n1 = 32
    a1 = _random_graph(k_adj1, n1)
    x1 = jax.random.normal(k_feat1, (n1, feature_number), jnp.float32)
    ref1 = _reference_forward(a1, x1, params)

    out1 = gcn_net_forward(a1, x1, params)                       # f32 path
    jax.block_until_ready(out1)
    assert out1.shape == (n1, label_number)
    assert jnp.allclose(out1, ref1, atol=1e-4, rtol=1e-4)

    out1_bf16 = gcn_net_forward(a1, x1, params, use_bf16=True)   # in-kernel bf16 MXU path
    jax.block_until_ready(out1_bf16)
    assert jnp.allclose(out1_bf16, ref1, atol=2e-2, rtol=2e-2)

    # --- larger graph: row-tiled two-pass path ('parallel' row axis, resident params) ---
    n2 = 512
    a2 = _random_graph(k_adj2, n2)
    x2 = jax.random.normal(k_feat2, (n2, feature_number), jnp.float32)
    ref2 = _reference_forward(a2, x2, params)

    out2 = gcn_net_forward(a2, x2, params, force_tiled=True, row_tile=128)
    jax.block_until_ready(out2)
    assert out2.shape == (n2, label_number)
    assert jnp.allclose(out2, ref2, atol=1e-3, rtol=1e-3)

    print("KERNEL_OK")
</pallas_src>

<mosaic_0001>
module attributes {stable_mosaic.version = 11 : i64} {
  func.func @_gcn_fused_kernel(%arg0: memref<32x32xf32, #tpu.memory_space<vmem>>, %arg1: memref<32x16xf32, #tpu.memory_space<vmem>>, %arg2: memref<17x16xf32, #tpu.memory_space<vmem>>, %arg3: memref<17x8xf32, #tpu.memory_space<vmem>>, %arg4: memref<32x8xf32, #tpu.memory_space<vmem>>) attributes {dimension_semantics = [], scalar_prefetch = 0 : i64, scratch_operands = 0 : i64, tpu.core_type = #tpu.core_type<tc>} {
    %c0 = arith.constant 0 : index
    %c0_0 = arith.constant 0 : index
    %0 = vector.load %arg0[%c0, %c0_0] : memref<32x32xf32, #tpu.memory_space<vmem>>, vector<32x32xf32>
    %c0_1 = arith.constant 0 : index
    %c0_2 = arith.constant 0 : index
    %1 = vector.load %arg1[%c0_1, %c0_2] : memref<32x16xf32, #tpu.memory_space<vmem>>, vector<32x16xf32>
    %c0_3 = arith.constant 0 : index
    %c0_4 = arith.constant 0 : index
    %2 = vector.load %arg2[%c0_3, %c0_4] : memref<17x16xf32, #tpu.memory_space<vmem>>, vector<16x16xf32>
    %c16 = arith.constant 16 : index
    %c0_5 = arith.constant 0 : index
    %3 = vector.load %arg2[%c16, %c0_5] : memref<17x16xf32, #tpu.memory_space<vmem>>, vector<1x16xf32>
    %c0_6 = arith.constant 0 : index
    %c0_7 = arith.constant 0 : index
    %4 = vector.load %arg3[%c0_6, %c0_7] : memref<17x8xf32, #tpu.memory_space<vmem>>, vector<16x8xf32>
    %c16_8 = arith.constant 16 : index
    %c0_9 = arith.constant 0 : index
    %5 = vector.load %arg3[%c16_8, %c0_9] : memref<17x8xf32, #tpu.memory_space<vmem>>, vector<1x8xf32>
    %cst = arith.constant dense<0.000000e+00> : vector<32x16xf32>
    %6 = tpu.matmul %0, %1, %cst {dimension_numbers = #tpu.dot_dimension_numbers<[1], [0], [0], [1], [0, 0, 1, 1], [], []>} : vector<32x32xf32>, vector<32x16xf32>, vector<32x16xf32> -> vector<32x16xf32>
    %cst_10 = arith.constant dense<0.000000e+00> : vector<32x16xf32>
    %7 = tpu.matmul %6, %2, %cst_10 {dimension_numbers = #tpu.dot_dimension_numbers<[1], [0], [0], [1], [0, 0, 1, 1], [], []>} : vector<32x16xf32>, vector<16x16xf32>, vector<32x16xf32> -> vector<32x16xf32>
    %8 = vector.broadcast %3 : vector<1x16xf32> to vector<32x16xf32>
    %9 = arith.addf %7, %8 : vector<32x16xf32>
    %cst_11 = arith.constant 0.000000e+00 : f32
    %10 = vector.broadcast %cst_11 : f32 to vector<32x16xf32>
    %11 = arith.maximumf %9, %10 : vector<32x16xf32>
    %cst_12 = arith.constant dense<0.000000e+00> : vector<32x8xf32>
    %12 = tpu.matmul %11, %4, %cst_12 {dimension_numbers = #tpu.dot_dimension_numbers<[1], [0], [0], [1], [0, 0, 1, 1], [], []>} : vector<32x16xf32>, vector<16x8xf32>, vector<32x8xf32> -> vector<32x8xf32>
    %cst_13 = arith.constant dense<0.000000e+00> : vector<32x8xf32>
    %13 = tpu.matmul %0, %12, %cst_13 {dimension_numbers = #tpu.dot_dimension_numbers<[1], [0], [0], [1], [0, 0, 1, 1], [], []>} : vector<32x32xf32>, vector<32x8xf32>, vector<32x8xf32> -> vector<32x8xf32>
    %14 = vector.broadcast %5 : vector<1x8xf32> to vector<32x8xf32>
    %15 = arith.addf %13, %14 : vector<32x8xf32>
    %c0_14 = arith.constant 0 : index
    %c0_15 = arith.constant 0 : index
    %16 = vector.load %arg4[%c0_14, %c0_15] : memref<32x8xf32, #tpu.memory_space<vmem>>, vector<32x8xf32>
    tpu.vector_store %arg4[%c0_14, %c0_15], %15 {strides = array<i32>} : memref<32x8xf32, #tpu.memory_space<vmem>>, vector<32x8xf32>,
    return
  }
}

</mosaic_0001>

<llo_original>
// kernel: gcn_net_forward.1
$region0: #{gcn_net_forward.1}
  #allocation0 [shape = 'u32[]', space=smem, size = 0x4, offset = 0x4, fixed_abs, tag = 'smem constant byte address 0x4 - core index']
  #allocation1 [shape = 'u32[144,128]{1,0:T(1,128)}', space=vmem, size = 0x12000, scoped, tag = 'internal scratch']
  %s0 = inlined_call_operand.vmem [shape: f32[32,32], index: 0, kind: input, shape index: {}]
  %s1 = inlined_call_operand.vmem [shape: f32[32,16], index: 1, kind: input, shape index: {}]
  %s2 = inlined_call_operand.vmem [shape: f32[17,16], index: 2, kind: input, shape index: {}]
  %s3 = inlined_call_operand.vmem [shape: f32[17,8], index: 3, kind: input, shape index: {}]
  %s4 = inlined_call_operand.vmem [shape: f32[32,8], index: 4, kind: output, shape index: {}]
  %s5 = sld [smem:[#allocation0]]
  $region26: #{gcn_net_forward.1} parent=0
    _
  %s7 = ssub.s32 1, %s5
  %s8 = scalar_select 0, %s7, %s5
  // Predicated region
  $region2: #{gcn_net_forward.1} parent=0 // pred_check
    _
  $region3: #{gcn_net_forward.1} parent=0 // pred_check_branch
    %10 = sbr.rel (0) target = $region5
  $region4: #{gcn_net_forward.1} parent=0 // pred_region
    _
  $region5: #{gcn_net_forward.1} parent=0 // pred_fallthru
    _
  // Predicated region
  $region6: #{gcn_net_forward.1} parent=0 // pred_check
    _
  $region7: #{gcn_net_forward.1} parent=0 // pred_check_branch
    %12 = sbr.rel (0) target = $region9
  $region8: #{gcn_net_forward.1} parent=0 // pred_region
    _
  $region9: #{gcn_net_forward.1} parent=0 // pred_fallthru
    _
  // Predicated region
  $region10: #{gcn_net_forward.1} parent=0 // pred_check
    _
  $region11: #{gcn_net_forward.1} parent=0 // pred_check_branch
    %14 = sbr.rel (0) target = $region13
  $region12: #{gcn_net_forward.1} parent=0 // pred_region
    _
  $region13: #{gcn_net_forward.1} parent=0 // pred_fallthru
    _
  // Predicated region
  $region14: #{gcn_net_forward.1} parent=0 // pred_check
    _
  $region15: #{gcn_net_forward.1} parent=0 // pred_check_branch
    %16 = sbr.rel (0) target = $region17
  $region16: #{gcn_net_forward.1} parent=0 // pred_region
    _
  $region17: #{gcn_net_forward.1} parent=0 // pred_fallthru
    _
  %v17 = vld [vmem:[%s0] sm:$0xff]
  %v18 = vld [vmem:[%s0 + $0x8] sm:$0xff]
  %v19 = vld [vmem:[%s0 + $0x10] sm:$0xff]
  %v20 = vld [vmem:[%s0 + $0x18] sm:$0xff]
  %v21 = vld [vmem:[%s1] sm:$0xff]
  %v22 = vld [vmem:[%s1 + $0x8] sm:$0xff]
  %v23 = vld [vmem:[%s1 + $0x10] sm:$0xff]
  %v24 = vld [vmem:[%s1 + $0x18] sm:$0xff]
  %v25 = vld [vmem:[%s2] sm:$0xff]
  %v26 = vld [vmem:[%s2 + $0x8] sm:$0xff]
  %v27 = vld [vmem:[%s2 + $0x10] sm:$0x1]
  %v28 = vld [vmem:[%s3] sm:$0xff]
  %v29 = vld [vmem:[%s3 + $0x8] sm:$0xff]
  %v30 = vld [vmem:[%s3 + $0x10] sm:$0x1]
  %vm31 = vcmask 261120
  %v33 = vsel %vm31, %v17, 0
  %v36 = vsel %vm31, %v18, 0
  %v39 = vsel %vm31, %v19, 0
  %v42 = vsel %vm31, %v20, 0
  %44 = vmatprep.subr.mxu0 0.0
  %45 = vmatpush1.msra.mxu0 %v21
  %46 = vmatprep.subr.mxu0 0.0
  %47 = vmatpush1.msra.mxu0 %v22
  %48 = vmatprep.subr.mxu0 0.0
  %49 = vmatpush1.msra.mxu0 %v23
  %50 = vmatprep.subr.mxu0 0.0
  %51 = vmatpush1.msra.mxu0 %v24
  %52 = vmatprep.subr.mxu0 0.0
  %53 = vmatpush1.msra.mxu0 0.0
  %54 = vmatprep.subr.mxu0 0.0
  %55 = vmatpush1.msra.mxu0 0.0
  %56 = vmatprep.subr.mxu0 0.0
  %57 = vmatpush1.msra.mxu0 0.0
  %58 = vmatprep.subr.mxu0 0.0
  %59 = vmatpush1.msra.mxu0 0.0
  %60 = vmatprep.subr.mxu0 0.0
  %61 = vmatpush1.msra.mxu0 0.0
  %62 = vmatprep.subr.mxu0 0.0
  %63 = vmatpush1.msra.mxu0 0.0
  %64 = vmatprep.subr.mxu0 0.0
  %65 = vmatpush1.msra.mxu0 0.0
  %66 = vmatprep.subr.mxu0 0.0
  %67 = vmatpush1.msra.mxu0 0.0
  %68 = vmatprep.subr.mxu0 0.0
  %69 = vmatpush1.msra.mxu0 0.0
  %70 = vmatprep.subr.mxu0 0.0
  %71 = vmatpush1.msra.mxu0 0.0
  %72 = vmatprep.subr.mxu0 0.0
  %73 = vmatpush1.msra.mxu0 0.0
  %74 = vmatprep.subr.mxu0 0.0
  %75 = vmatpush1.msra.mxu0 0.0
  %76 = vmatprep.subr.mxu0 0.0
  %77 = vmatpush1.msra.mxu0 0.0
  %78 = vmatprep.subr.mxu0 0.0
  %79 = vmatpush1.msra.mxu0 0.0
  %80 = vmatprep.subr.mxu0 0.0
  %81 = vmatpush1.msra.mxu0 0.0
  %82 = vmatprep.subr.mxu0 0.0
  %83 = vmatpush1.msra.mxu0 0.0
  %84 = vmatprep.subr.mxu0 0.0
  %85 = vmatpush1.msra.mxu0 0.0
  %86 = vmatprep.subr.mxu0 0.0
  %87 = vmatpush1.msra.mxu0 0.0
  %88 = vmatprep.subr.mxu0 0.0
  %89 = vmatpush1.msra.mxu0 0.0
  %90 = vmatprep.subr.mxu0 0.0
  %91 = vmatpush1.msra.mxu0 0.0
  %92 = vmatprep.subr.mxu0 0.0
  %93 = vmatpush1.msra.mxu0 0.0
  %94 = vmatprep.subr.mxu0 0.0
  %95 = vmatpush1.msra.mxu0 0.0
  %96 = vmatprep.subr.mxu0 0.0
  %97 = vmatpush1.msra.mxu0 0.0
  %98 = vmatprep.subr.mxu0 0.0
  %99 = vmatpush1.msra.mxu0 0.0
  %100 = vmatprep.subr.mxu0 0.0
  %101 = vmatpush1.msra.mxu0 0.0
  %102 = vmatprep.subr.mxu0 0.0
  %103 = vmatpush1.msra.mxu0 0.0
  %104 = vmatprep.subr.mxu0 0.0
  %105 = vmatpush1.msra.mxu0 0.0
  %106 = vmatprep.subr.mxu0 0.0
  %107 = vmatpush1.msra.mxu0 0.0
  %108 = vmatprep.mubr.f32.mxu0 0.0
  %109 = vmatmul.mubr.f32.gmra.mrb[0].mxu0 %v33
  %v110 = vpop.f32.mrb[0].mxu0
  %v111 = vadd.f32 0.0, %v110
  %v112 = vpop.f32.mrb[0].mxu0
  %113 = vmatprep.mubr.f32.mxu0 0.0
  %114 = vmatmul.mubr.f32.gmra.mrb[0].mxu0 %v36
  %v115 = vpop.f32.mrb[0].mxu0
  %v116 = vadd.f32 0.0, %v115
  %v117 = vpop.f32.mrb[0].mxu0
  %118 = vmatprep.mubr.f32.mxu0 0.0
  %119 = vmatmul.mubr.f32.gmra.mrb[0].mxu0 %v39
  %v120 = vpop.f32.mrb[0].mxu0
  %v121 = vadd.f32 0.0, %v120
  %v122 = vpop.f32.mrb[0].mxu0
  %123 = vmatprep.mubr.f32.mxu0 0.0
  %124 = vmatmul.mubr.f32.gmra.mrb[0].mxu0 %v42
  %v125 = vpop.f32.mrb[0].mxu0
  %v126 = vadd.f32 0.0, %v125
  %v127 = vpop.f32.mrb[0].mxu0
  %128 = vdwg.mxu0
  %v129 = vlaneseq
  %v130 = vshrl.u32 %v129, 7
  %v131 = vsub.s32 0, %v130
  %v132 = vrot.slane %v27, %v131
  %vm133 = vcmask 130048
  %v135 = vsel %vm133, %v111, 0
  %v138 = vsel %vm133, %v116, 0
  %v141 = vsel %vm133, %v121, 0
  %v144 = vsel %vm133, %v126, 0
  %146 = vmatprep.subr.mxu0 0.0
  %147 = vmatpush1.msra.mxu0 %v25
  %148 = vmatprep.subr.mxu0 0.0
  %149 = vmatpush1.msra.mxu0 %v26
  %150 = vmatprep.subr.mxu0 0.0
  %151 = vmatpush1.msra.mxu0 0.0
  %152 = vmatprep.subr.mxu0 0.0
  %153 = vmatpush1.msra.mxu0 0.0
  %154 = vmatprep.subr.mxu0 0.0
  %155 = vmatpush1.msra.mxu0 0.0
  %156 = vmatprep.subr.mxu0 0.0
  %157 = vmatpush1.msra.mxu0 0.0
  %158 = vmatprep.subr.mxu0 0.0
  %159 = vmatpush1.msra.mxu0 0.0
  %160 = vmatprep.subr.mxu0 0.0
  %161 = vmatpush1.msra.mxu0 0.0
  %162 = vmatprep.subr.mxu0 0.0
  %163 = vmatpush1.msra.mxu0 0.0
  %164 = vmatprep.subr.mxu0 0.0
  %165 = vmatpush1.msra.mxu0 0.0
  %166 = vmatprep.subr.mxu0 0.0
  %167 = vmatpush1.msra.mxu0 0.0
  %168 = vmatprep.subr.mxu0 0.0
  %169 = vmatpush1.msra.mxu0 0.0
  %170 = vmatprep.subr.mxu0 0.0
  %171 = vmatpush1.msra.mxu0 0.0
  %172 = vmatprep.subr.mxu0 0.0
  %173 = vmatpush1.msra.mxu0 0.0
  %174 = vmatprep.subr.mxu0 0.0
  %175 = vmatpush1.msra.mxu0 0.0
  %176 = vmatprep.subr.mxu0 0.0
  %177 = vmatpush1.msra.mxu0 0.0
  %178 = vmatprep.subr.mxu0 0.0
  %179 = vmatpush1.msra.mxu0 0.0
  %180 = vmatprep.subr.mxu0 0.0
  %181 = vmatpush1.msra.mxu0 0.0
  %182 = vmatprep.subr.mxu0 0.0
  %183 = vmatpush1.msra.mxu0 0.0
  %184 = vmatprep.subr.mxu0 0.0
  %185 = vmatpush1.msra.mxu0 0.0
  %186 = vmatprep.subr.mxu0 0.0
  %187 = vmatpush1.msra.mxu0 0.0
  %188 = vmatprep.subr.mxu0 0.0
  %189 = vmatpush1.msra.mxu0 0.0
  %190 = vmatprep.subr.mxu0 0.0
  %191 = vmatpush1.msra.mxu0 0.0
  %192 = vmatprep.subr.mxu0 0.0
  %193 = vmatpush1.msra.mxu0 0.0
  %194 = vmatprep.subr.mxu0 0.0
  %195 = vmatpush1.msra.mxu0 0.0
  %196 = vmatprep.subr.mxu0 0.0
  %197 = vmatpush1.msra.mxu0 0.0
  %198 = vmatprep.subr.mxu0 0.0
  %199 = vmatpush1.msra.mxu0 0.0
  %200 = vmatprep.subr.mxu0 0.0
  %201 = vmatpush1.msra.mxu0 0.0
  %202 = vmatprep.subr.mxu0 0.0
  %203 = vmatpush1.msra.mxu0 0.0
  %204 = vmatprep.subr.mxu0 0.0
  %205 = vmatpush1.msra.mxu0 0.0
  %206 = vmatprep.subr.mxu0 0.0
  %207 = vmatpush1.msra.mxu0 0.0
  %208 = vmatprep.subr.mxu0 0.0
  %209 = vmatpush1.msra.mxu0 0.0
  %210 = vmatprep.mubr.f32.mxu0 0.0
  %211 = vmatmul.mubr.f32.gmra.mrb[0].mxu0 %v135
  %v212 = vpop.f32.mrb[0].mxu0
  %v213 = vadd.f32 %v132, %v212
  %v214 = vpop.f32.mrb[0].mxu0
  %215 = vmatprep.mubr.f32.mxu0 0.0
  %216 = vmatmul.mubr.f32.gmra.mrb[0].mxu0 %v138
  %v217 = vpop.f32.mrb[0].mxu0
  %v218 = vadd.f32 %v132, %v217
  %v219 = vpop.f32.mrb[0].mxu0
  %220 = vmatprep.mubr.f32.mxu0 0.0
  %221 = vmatmul.mubr.f32.gmra.mrb[0].mxu0 %v141
  %v222 = vpop.f32.mrb[0].mxu0
  %v223 = vadd.f32 %v132, %v222
  %v224 = vpop.f32.mrb[0].mxu0
  %225 = vmatprep.mubr.f32.mxu0 0.0
  %226 = vmatmul.mubr.f32.gmra.mrb[0].mxu0 %v144
  %v227 = vpop.f32.mrb[0].mxu0
  %v228 = vadd.f32 %v132, %v227
  %v229 = vpop.f32.mrb[0].mxu0
  %230 = vdwg.mxu0
  %v231 = vmax.f32 %v213, 0.0
  %v232 = vmax.f32 %v218, 0.0
  %v233 = vmax.f32 %v223, 0.0
  %v234 = vmax.f32 %v228, 0.0
  %v236 = vsel %vm133, %v231, 0
  %v239 = vsel %vm133, %v232, 0
  %v242 = vsel %vm133, %v233, 0
  %v245 = vsel %vm133, %v234, 0
  %247 = vmatprep.subr.mxu0 0.0
  %248 = vmatpush1.msra.mxu0 %v28
  %249 = vmatprep.subr.mxu0 0.0
  %250 = vmatpush1.msra.mxu0 %v29
  %251 = vmatprep.subr.mxu0 0.0
  %252 = vmatpush1.msra.mxu0 0.0
  %253 = vmatprep.subr.mxu0 0.0
  %254 = vmatpush1.msra.mxu0 0.0
  %255 = vmatprep.subr.mxu0 0.0
  %256 = vmatpush1.msra.mxu0 0.0
  %257 = vmatprep.subr.mxu0 0.0
  %258 = vmatpush1.msra.mxu0 0.0
  %259 = vmatprep.subr.mxu0 0.0
  %260 = vmatpush1.msra.mxu0 0.0
  %261 = vmatprep.subr.mxu0 0.0
  %262 = vmatpush1.msra.mxu0 0.0
  %263 = vmatprep.subr.mxu0 0.0
  %264 = vmatpush1.msra.mxu0 0.0
  %265 = vmatprep.subr.mxu0 0.0
  %266 = vmatpush1.msra.mxu0 0.0
  %267 = vmatprep.subr.mxu0 0.0
  %268 = vmatpush1.msra.mxu0 0.0
  %269 = vmatprep.subr.mxu0 0.0
  %270 = vmatpush1.msra.mxu0 0.0
  %271 = vmatprep.subr.mxu0 0.0
  %272 = vmatpush1.msra.mxu0 0.0
  %273 = vmatprep.subr.mxu0 0.0
  %274 = vmatpush1.msra.mxu0 0.0
  %275 = vmatprep.subr.mxu0 0.0
  %276 = vmatpush1.msra.mxu0 0.0
  %277 = vmatprep.subr.mxu0 0.0
  %278 = vmatpush1.msra.mxu0 0.0
  %279 = vmatprep.subr.mxu0 0.0
  %280 = vmatpush1.msra.mxu0 0.0
  %281 = vmatprep.subr.mxu0 0.0
  %282 = vmatpush1.msra.mxu0 0.0
  %283 = vmatprep.subr.mxu0 0.0
  %284 = vmatpush1.msra.mxu0 0.0
  %285 = vmatprep.subr.mxu0 0.0
  %286 = vmatpush1.msra.mxu0 0.0
  %287 = vmatprep.subr.mxu0 0.0
  %288 = vmatpush1.msra.mxu0 0.0
  %289 = vmatprep.subr.mxu0 0.0
  %290 = vmatpush1.msra.mxu0 0.0
  %291 = vmatprep.subr.mxu0 0.0
  %292 = vmatpush1.msra.mxu0 0.0
  %293 = vmatprep.subr.mxu0 0.0
  %294 = vmatpush1.msra.mxu0 0.0
  %295 = vmatprep.subr.mxu0 0.0
  %296 = vmatpush1.msra.mxu0 0.0
  %297 = vmatprep.subr.mxu0 0.0
  %298 = vmatpush1.msra.mxu0 0.0
  %299 = vmatprep.subr.mxu0 0.0
  %300 = vmatpush1.msra.mxu0 0.0
  %301 = vmatprep.subr.mxu0 0.0
  %302 = vmatpush1.msra.mxu0 0.0
  %303 = vmatprep.subr.mxu0 0.0
  %304 = vmatpush1.msra.mxu0 0.0
  %305 = vmatprep.subr.mxu0 0.0
  %306 = vmatpush1.msra.mxu0 0.0
  %307 = vmatprep.subr.mxu0 0.0
  %308 = vmatpush1.msra.mxu0 0.0
  %309 = vmatprep.subr.mxu0 0.0
  %310 = vmatpush1.msra.mxu0 0.0
  %311 = vmatprep.mubr.f32.mxu0 0.0
  %312 = vmatmul.mubr.f32.gmra.mrb[0].mxu0 %v236
  %v313 = vpop.f32.mrb[0].mxu0
  %v314 = vadd.f32 0.0, %v313
  %v315 = vpop.f32.mrb[0].mxu0
  %316 = vmatprep.mubr.f32.mxu0 0.0
  %317 = vmatmul.mubr.f32.gmra.mrb[0].mxu0 %v239
  %v318 = vpop.f32.mrb[0].mxu0
  %v319 = vadd.f32 0.0, %v318
  %v320 = vpop.f32.mrb[0].mxu0
  %321 = vmatprep.mubr.f32.mxu0 0.0
  %322 = vmatmul.mubr.f32.gmra.mrb[0].mxu0 %v242
  %v323 = vpop.f32.mrb[0].mxu0
  %v324 = vadd.f32 0.0, %v323
  %v325 = vpop.f32.mrb[0].mxu0
  %326 = vmatprep.mubr.f32.mxu0 0.0
  %327 = vmatmul.mubr.f32.gmra.mrb[0].mxu0 %v245
  %v328 = vpop.f32.mrb[0].mxu0
  %v329 = vadd.f32 0.0, %v328
  %v330 = vpop.f32.mrb[0].mxu0
  %331 = vdwg.mxu0
  %v332 = vlaneseq
  %v333 = vshrl.u32 %v332, 7
  %v334 = vsub.s32 0, %v333
  %v335 = vrot.slane %v30, %v334
  %336 = vmatprep.subr.mxu0 0.0
  %337 = vmatpush1.msra.mxu0 %v314
  %338 = vmatprep.subr.mxu0 0.0
  %339 = vmatpush1.msra.mxu0 %v319
  %340 = vmatprep.subr.mxu0 0.0
  %341 = vmatpush1.msra.mxu0 %v324
  %342 = vmatprep.subr.mxu0 0.0
  %343 = vmatpush1.msra.mxu0 %v329
  %344 = vmatprep.subr.mxu0 0.0
  %345 = vmatpush1.msra.mxu0 0.0
  %346 = vmatprep.subr.mxu0 0.0
  %347 = vmatpush1.msra.mxu0 0.0
  %348 = vmatprep.subr.mxu0 0.0
  %349 = vmatpush1.msra.mxu0 0.0
  %350 = vmatprep.subr.mxu0 0.0
  %351 = vmatpush1.msra.mxu0 0.0
  %352 = vmatprep.subr.mxu0 0.0
  %353 = vmatpush1.msra.mxu0 0.0
  %354 = vmatprep.subr.mxu0 0.0
  %355 = vmatpush1.msra.mxu0 0.0
  %356 = vmatprep.subr.mxu0 0.0
  %357 = vmatpush1.msra.mxu0 0.0
  %358 = vmatprep.subr.mxu0 0.0
  %359 = vmatpush1.msra.mxu0 0.0
  %360 = vmatprep.subr.mxu0 0.0
  %361 = vmatpush1.msra.mxu0 0.0
  %362 = vmatprep.subr.mxu0 0.0
  %363 = vmatpush1.msra.mxu0 0.0
  %364 = vmatprep.subr.mxu0 0.0
  %365 = vmatpush1.msra.mxu0 0.0
  %366 = vmatprep.subr.mxu0 0.0
  %367 = vmatpush1.msra.mxu0 0.0
  %368 = vmatprep.subr.mxu0 0.0
  %369 = vmatpush1.msra.mxu0 0.0
  %370 = vmatprep.subr.mxu0 0.0
  %371 = vmatpush1.msra.mxu0 0.0
  %372 = vmatprep.subr.mxu0 0.0
  %373 = vmatpush1.msra.mxu0 0.0
  %374 = vmatprep.subr.mxu0 0.0
  %375 = vmatpush1.msra.mxu0 0.0
  %376 = vmatprep.subr.mxu0 0.0
  %377 = vmatpush1.msra.mxu0 0.0
  %378 = vmatprep.subr.mxu0 0.0
  %379 = vmatpush1.msra.mxu0 0.0
  %380 = vmatprep.subr.mxu0 0.0
  %381 = vmatpush1.msra.mxu0 0.0
  %382 = vmatprep.subr.mxu0 0.0
  %383 = vmatpush1.msra.mxu0 0.0
  %384 = vmatprep.subr.mxu0 0.0
  %385 = vmatpush1.msra.mxu0 0.0
  %386 = vmatprep.subr.mxu0 0.0
  %387 = vmatpush1.msra.mxu0 0.0
  %388 = vmatprep.subr.mxu0 0.0
  %389 = vmatpush1.msra.mxu0 0.0
  %390 = vmatprep.subr.mxu0 0.0
  %391 = vmatpush1.msra.mxu0 0.0
  %392 = vmatprep.subr.mxu0 0.0
  %393 = vmatpush1.msra.mxu0 0.0
  %394 = vmatprep.subr.mxu0 0.0
  %395 = vmatpush1.msra.mxu0 0.0
  %396 = vmatprep.subr.mxu0 0.0
  %397 = vmatpush1.msra.mxu0 0.0
  %398 = vmatprep.subr.mxu0 0.0
  %399 = vmatpush1.msra.mxu0 0.0
  %400 = vmatprep.mubr.f32.mxu0 0.0
  %401 = vmatmul.mubr.f32.gmra.mrb[0].mxu0 %v33
  %v402 = vpop.f32.mrb[0].mxu0
  %v403 = vadd.f32 %v335, %v402
  %v404 = vpop.f32.mrb[0].mxu0
  %405 = vmatprep.mubr.f32.mxu0 0.0
  %406 = vmatmul.mubr.f32.gmra.mrb[0].mxu0 %v36
  %v407 = vpop.f32.mrb[0].mxu0
  %v408 = vadd.f32 %v335, %v407
  %v409 = vpop.f32.mrb[0].mxu0
  %410 = vmatprep.mubr.f32.mxu0 0.0
  %411 = vmatmul.mubr.f32.gmra.mrb[0].mxu0 %v39
  %v412 = vpop.f32.mrb[0].mxu0
  %v413 = vadd.f32 %v335, %v412
  %v414 = vpop.f32.mrb[0].mxu0
  %415 = vmatprep.mubr.f32.mxu0 0.0
  %416 = vmatmul.mubr.f32.gmra.mrb[0].mxu0 %v42
  %v417 = vpop.f32.mrb[0].mxu0
  %v418 = vadd.f32 %v335, %v417
  %v419 = vpop.f32.mrb[0].mxu0
  %420 = vdwg.mxu0
  %vm421 = vcmask 64512
  %422 = vst.msk [vmem:[%s4] sm:$0xff] %vm421, %v403
  %423 = vst.msk [vmem:[%s4 + $0x8] sm:$0xff] %vm421, %v408
  %424 = vst.msk [vmem:[%s4 + $0x10] sm:$0xff] %vm421, %v413
  %425 = vst.msk [vmem:[%s4 + $0x18] sm:$0xff] %vm421, %v418
  // Predicated region
  $region18: #{gcn_net_forward.1} parent=0 // pred_check
    _
  $region19: #{gcn_net_forward.1} parent=0 // pred_check_branch
    %427 = sbr.rel (0) target = $region21
  $region20: #{gcn_net_forward.1} parent=0 // pred_region
    _
  $region21: #{gcn_net_forward.1} parent=0 // pred_fallthru
    _
  // Predicated region
  $region22: #{gcn_net_forward.1} parent=0 // pred_check
    _
  $region23: #{gcn_net_forward.1} parent=0 // pred_check_branch
    %429 = sbr.rel (0) target = $region25
  $region24: #{gcn_net_forward.1} parent=0 // pred_region
    _
  $region25: #{gcn_net_forward.1} parent=0 // pred_fallthru
    _

</llo_original>
